<compile_context>
chip_gen: v5e
topology: v5e:2x2
jax: 0.10.0
libtpu: 0.0.40
codegen_flags: <defaults>
</compile_context>

<pallas_src>
import functools

import jax
import jax.numpy as jnp
from jax.experimental import pallas as pl
from jax.experimental.pallas import tpu as pltpu

EPS = 1e-8


def _ow_loss_kernel(logits_ref, labels_ref, packed_ref, sums_ref, counts_ref,
                    *, n_pix, hinged, delta):
    b = pl.program_id(0)
    j = pl.program_id(1)

    @pl.when(jnp.logical_and(b == 0, j == 0))
    def _():
        sums_ref[...] = jnp.zeros_like(sums_ref)
        counts_ref[...] = jnp.zeros_like(counts_ref)

    logits = logits_ref[0]                                   # (C, T) f32
    labels = labels_ref[0]                                   # (1, T) int32
    C, T = logits.shape

    lane = jax.lax.broadcasted_iota(jnp.int32, (1, T), 1)
    valid = (j * T + lane) < n_pix                           # (1, T) in-bounds pixels

    class_ids = jax.lax.broadcasted_iota(jnp.int32, (C, T), 0)
    onehot = ((labels == class_ids) & valid).astype(jnp.float32)     # (C, T)

    # Gather per-pixel MAV row and inverse-variance row in one fused MXU matmul.
    combined = jnp.dot(packed_ref[...], onehot,
                       preferred_element_type=jnp.float32)   # (2C, T)
    mav_pix = combined[:C]
    ivar_pix = combined[C:]

    d = jnp.abs(logits - mav_pix) * ivar_pix                 # scaled L1, (C, T)
    if hinged:
        d = jnp.maximum(d - delta, 0.0)
    d = jnp.where(valid, d, 0.0)                             # kill OOB-lane garbage

    per_pix = jnp.sum(d, axis=0, keepdims=True)              # (1, T)
    sums_ref[...] += jnp.sum(onehot * per_pix, axis=1, keepdims=True)   # (C, 1)
    counts_ref[...] += jnp.sum(onehot, axis=1, keepdims=True)           # (C, 1)


def ow_loss_forward(logits, sem_gt, prev_features, prev_count, var,
                    hinged=False, delta=0.1, tile=16384):
    """Functional equivalent of OWLoss.forward given the 'previous' state."""
    B, C, H, W = logits.shape
    HW = H * W

    # Pixel tile on the lane axis: multiple of 128, capped at the padded row length.
    tile = max(128, (int(tile) // 128) * 128)
    tile = min(tile, ((HW + 127) // 128) * 128)
    grid = (B, pl.cdiv(HW, tile))

    logits_r = logits.reshape(B, C, HW).astype(jnp.float32)   # free view of NCHW
    labels_r = sem_gt.reshape(B, 1, HW).astype(jnp.int32)

    # (2C, C): rows 0..C-1 = MAV^T, rows C..2C-1 = (1/(var+eps))^T, so that
    # packed @ onehot gathers both per-pixel statistic rows in a single matmul.
    mav_t = prev_features.astype(jnp.float32).T
    ivar_t = (1.0 / (var.astype(jnp.float32) + EPS)).T
    packed = jnp.concatenate([mav_t, ivar_t], axis=0)

    kernel = functools.partial(_ow_loss_kernel, n_pix=HW,
                               hinged=bool(hinged), delta=float(delta))
    sums, counts = pl.pallas_call(
        kernel,
        out_shape=(jax.ShapeDtypeStruct((C, 1), jnp.float32),
                   jax.ShapeDtypeStruct((C, 1), jnp.float32)),
        grid_spec=pltpu.PrefetchScalarGridSpec(
            num_scalar_prefetch=0,
            grid=grid,
            in_specs=[pl.BlockSpec((1, C, tile), lambda b, j: (b, 0, j)),
                      pl.BlockSpec((1, 1, tile), lambda b, j: (b, 0, j)),
                      pl.BlockSpec((2 * C, C), lambda b, j: (0, 0))],
            out_specs=(pl.BlockSpec((C, 1), lambda b, j: (0, 0)),
                       pl.BlockSpec((C, 1), lambda b, j: (0, 0))),
        ),
        compiler_params=pltpu.CompilerParams(
            dimension_semantics=("arbitrary", "arbitrary")),
    )(logits_r, labels_r, packed)

    sums = sums[:, 0]
    counts = counts[:, 0]
    max_label = jnp.max(sem_gt).astype(jnp.int32)

    # Per-class mean: non-hinged means over (n_pix * C) elements, hinged over n_pix.
    denom = counts if hinged else counts * C
    per_class = sums / jnp.where(denom > 0, denom, 1.0)
    class_idx = jnp.arange(C)
    # gt_labels[:-1]  ==  all labels present in sem_gt except the maximum one.
    valid = (counts > 0) & (class_idx != max_label) & (prev_count.astype(jnp.float32) > 0)
    return jnp.sum(jnp.where(valid, per_class, 0.0))


def _ref_forward(logits, sem_gt, prev_features, prev_count, var, hinged, delta):
    """Pure-JAX mirror of the PyTorch forward (labels in [0, C))."""
    B, C, H, W = logits.shape
    lp = jnp.transpose(logits, (0, 2, 3, 1)).reshape(-1, C).astype(jnp.float32)
    gt = sem_gt.reshape(-1).astype(jnp.int32)
    max_label = jnp.max(gt)
    acc = jnp.float32(0.0)
    for l in range(C):
        mask = gt == l
        n = jnp.sum(mask)
        d = jnp.abs(lp - prev_features[l][None, :]) / (var[l][None, :] + EPS)
        if hinged:
            v = jnp.sum(jnp.maximum(d - delta, 0.0), axis=1)
            contrib = jnp.sum(jnp.where(mask, v, 0.0)) / jnp.maximum(n, 1)
        else:
            contrib = jnp.sum(jnp.where(mask[:, None], d, 0.0)) / jnp.maximum(n * C, 1)
        valid = (n > 0) & (l != max_label) & (prev_count[l] > 0)
        acc = acc + jnp.where(valid, contrib, 0.0)
    return acc


if __name__ == "__main__":
    key = jax.random.PRNGKey(0)
    B, C, H, W = 2, 8, 16, 16
    k1, k2, k3, k4 = jax.random.split(key, 4)

    logits = jax.random.normal(k1, (B, C, H, W), jnp.float32)
    sem_gt = jax.random.randint(k2, (B, H, W), 0, C)
    # Deterministic synthetic "previous" state (module buffers, not a checkpoint).
    prev_features = jax.random.normal(k3, (C, C), jnp.float32)
    var = jax.random.uniform(k4, (C, C), jnp.float32, minval=0.5, maxval=1.5)
    prev_count = jnp.array([0.0, 5.0, 3.0, 7.0, 2.0, 9.0, 4.0, 6.0], jnp.float32)

    ok = True
    for hinged in (False, True):
        loss = ow_loss_forward(logits, sem_gt, prev_features, prev_count, var,
                               hinged=hinged, delta=0.1)
        loss = jax.block_until_ready(loss)
        ref = _ref_forward(logits, sem_gt, prev_features, prev_count, var,
                           hinged=hinged, delta=0.1)
        if not jnp.allclose(loss, ref, rtol=1e-4, atol=1e-4):
            ok = False
            print(f"MISMATCH hinged={hinged}: kernel={float(loss)} ref={float(ref)}")

    if ok:
        print("KERNEL_OK")
</pallas_src>

<mosaic_0001>
module attributes {stable_mosaic.version = 11 : i64} {
  func.func @_ow_loss_kernel(%arg0: i32, %arg1: i32, %arg2: memref<1x8x256xf32, #tpu.memory_space<vmem>>, %arg3: memref<1x1x256xi32, #tpu.memory_space<vmem>>, %arg4: memref<16x8xf32, #tpu.memory_space<vmem>>, %arg5: memref<8x1xf32, #tpu.memory_space<vmem>>, %arg6: memref<8x1xf32, #tpu.memory_space<vmem>>) attributes {dimension_semantics = [#tpu.dimension_semantics<arbitrary>, #tpu.dimension_semantics<arbitrary>], iteration_bounds = array<i64: 2, 1>, scalar_prefetch = 0 : i64, scratch_operands = 0 : i64, tpu.core_type = #tpu.core_type<tc>, window_params = [{transform_indices = @transform_0, window_bounds = array<i64: 1, 8, 256>}, {transform_indices = @transform_1, window_bounds = array<i64: 1, 1, 256>}, {pipeline_mode = #tpu.pipeline_mode<synchronous>, transform_indices = @transform_2, window_bounds = array<i64: 16, 8>}, {pipeline_mode = #tpu.pipeline_mode<synchronous>, transform_indices = @transform_3, window_bounds = array<i64: 8, 1>}, {pipeline_mode = #tpu.pipeline_mode<synchronous>, transform_indices = @transform_4, window_bounds = array<i64: 8, 1>}]} {
    %c0_i32 = arith.constant 0 : i32
    %0 = arith.cmpi eq, %arg0, %c0_i32 : i32
    %c0_i32_0 = arith.constant 0 : i32
    %1 = arith.cmpi eq, %arg1, %c0_i32_0 : i32
    %2 = arith.andi %0, %1 : i1
    %3 = arith.extui %2 : i1 to i32
    %c0_i32_1 = arith.constant 0 : i32
    %4 = arith.cmpi ne, %3, %c0_i32_1 : i32
    scf.if %4 {
      %cst_22 = arith.constant 0.000000e+00 : f32
      %47 = vector.broadcast %cst_22 : f32 to vector<8x1xf32>
      %c0_23 = arith.constant 0 : index
      %c0_24 = arith.constant 0 : index
      %48 = vector.load %arg5[%c0_23, %c0_24] : memref<8x1xf32, #tpu.memory_space<vmem>>, vector<8x1xf32>
      tpu.vector_store %arg5[%c0_23, %c0_24], %47 {strides = array<i32>} : memref<8x1xf32, #tpu.memory_space<vmem>>, vector<8x1xf32>,
      %cst_25 = arith.constant 0.000000e+00 : f32
      %49 = vector.broadcast %cst_25 : f32 to vector<8x1xf32>
      %c0_26 = arith.constant 0 : index
      %c0_27 = arith.constant 0 : index
      %50 = vector.load %arg6[%c0_26, %c0_27] : memref<8x1xf32, #tpu.memory_space<vmem>>, vector<8x1xf32>
      tpu.vector_store %arg6[%c0_26, %c0_27], %49 {strides = array<i32>} : memref<8x1xf32, #tpu.memory_space<vmem>>, vector<8x1xf32>,
    } else {
    }
    %c0 = arith.constant 0 : index
    %c0_2 = arith.constant 0 : index
    %c0_3 = arith.constant 0 : index
    %5 = vector.load %arg2[%c0, %c0_2, %c0_3] : memref<1x8x256xf32, #tpu.memory_space<vmem>>, vector<1x8x256xf32>
    %6 = vector.shape_cast %5 : vector<1x8x256xf32> to vector<8x256xf32>
    %c0_4 = arith.constant 0 : index
    %c0_5 = arith.constant 0 : index
    %c0_6 = arith.constant 0 : index
    %7 = vector.load %arg3[%c0_4, %c0_5, %c0_6] : memref<1x1x256xi32, #tpu.memory_space<vmem>>, vector<1x1x256xi32>
    %8 = vector.shape_cast %7 : vector<1x1x256xi32> to vector<1x256xi32>
    %9 = tpu.iota {dimensions = array<i32: 1>} : vector<1x256xi32>
    %c256_i32 = arith.constant 256 : i32
    %10 = arith.muli %arg1, %c256_i32 : i32
    %11 = vector.broadcast %10 : i32 to vector<1x256xi32>
    %12 = arith.addi %11, %9 : vector<1x256xi32>
    %c256_i32_7 = arith.constant 256 : i32
    %13 = vector.broadcast %c256_i32_7 : i32 to vector<1x256xi32>
    %14 = arith.cmpi slt, %12, %13 : vector<1x256xi32>
    %15 = tpu.iota {dimensions = array<i32: 0>} : vector<8x256xi32>
    %16 = vector.broadcast %8 : vector<1x256xi32> to vector<8x256xi32>
    %17 = arith.cmpi eq, %16, %15 : vector<8x256xi32>
    %18 = vector.broadcast %14 : vector<1x256xi1> to vector<8x256xi1>
    %19 = arith.andi %17, %18 : vector<8x256xi1>
    %20 = arith.extui %19 : vector<8x256xi1> to vector<8x256xi32>
    %21 = arith.sitofp %20 : vector<8x256xi32> to vector<8x256xf32>
    %c0_8 = arith.constant 0 : index
    %c0_9 = arith.constant 0 : index
    %22 = vector.load %arg4[%c0_8, %c0_9] : memref<16x8xf32, #tpu.memory_space<vmem>>, vector<16x8xf32>
    %cst = arith.constant dense<0.000000e+00> : vector<16x256xf32>
    %23 = tpu.matmul %22, %21, %cst {dimension_numbers = #tpu.dot_dimension_numbers<[1], [0], [0], [1], [0, 0, 1, 1], [], []>} : vector<16x8xf32>, vector<8x256xf32>, vector<16x256xf32> -> vector<16x256xf32>
    %24 = vector.extract_strided_slice %23 {offsets = [0, 0], sizes = [8, 256], strides = [1, 1]} : vector<16x256xf32> to vector<8x256xf32>
    %25 = vector.extract_strided_slice %23 {offsets = [8, 0], sizes = [8, 256], strides = [1, 1]} : vector<16x256xf32> to vector<8x256xf32>
    %26 = arith.subf %6, %24 : vector<8x256xf32>
    %27 = math.absf %26 : vector<8x256xf32>
    %28 = arith.mulf %27, %25 : vector<8x256xf32>
    %cst_10 = arith.constant 0.000000e+00 : f32
    %29 = vector.shape_cast %14 : vector<1x256xi1> to vector<1x256xi1>
    %30 = vector.broadcast %29 : vector<1x256xi1> to vector<8x256xi1>
    %31 = vector.broadcast %cst_10 : f32 to vector<8x256xf32>
    %32 = arith.select %30, %28, %31 : vector<8x256xi1>, vector<8x256xf32>
    %cst_11 = arith.constant dense<0.000000e+00> : vector<256xf32>
    %33 = vector.multi_reduction <add>, %32, %cst_11 [0] : vector<8x256xf32> to vector<256xf32>
    %34 = vector.shape_cast %33 : vector<256xf32> to vector<1x256xf32>
    %c0_12 = arith.constant 0 : index
    %c0_13 = arith.constant 0 : index
    %35 = vector.load %arg5[%c0_12, %c0_13] : memref<8x1xf32, #tpu.memory_space<vmem>>, vector<8x1xf32>
    %36 = vector.broadcast %34 : vector<1x256xf32> to vector<8x256xf32>
    %37 = arith.mulf %21, %36 : vector<8x256xf32>
    %cst_14 = arith.constant dense<0.000000e+00> : vector<8xf32>
    %38 = vector.multi_reduction <add>, %37, %cst_14 [1] : vector<8x256xf32> to vector<8xf32>
    %39 = vector.shape_cast %38 : vector<8xf32> to vector<8x1xf32>
    %40 = arith.addf %35, %39 : vector<8x1xf32>
    %c0_15 = arith.constant 0 : index
    %c0_16 = arith.constant 0 : index
    %41 = vector.load %arg5[%c0_15, %c0_16] : memref<8x1xf32, #tpu.memory_space<vmem>>, vector<8x1xf32>
    tpu.vector_store %arg5[%c0_15, %c0_16], %40 {strides = array<i32>} : memref<8x1xf32, #tpu.memory_space<vmem>>, vector<8x1xf32>,
    %c0_17 = arith.constant 0 : index
    %c0_18 = arith.constant 0 : index
    %42 = vector.load %arg6[%c0_17, %c0_18] : memref<8x1xf32, #tpu.memory_space<vmem>>, vector<8x1xf32>
    %cst_19 = arith.constant dense<0.000000e+00> : vector<8xf32>
    %43 = vector.multi_reduction <add>, %21, %cst_19 [1] : vector<8x256xf32> to vector<8xf32>
    %44 = vector.shape_cast %43 : vector<8xf32> to vector<8x1xf32>
    %45 = arith.addf %42, %44 : vector<8x1xf32>
    %c0_20 = arith.constant 0 : index
    %c0_21 = arith.constant 0 : index
    %46 = vector.load %arg6[%c0_20, %c0_21] : memref<8x1xf32, #tpu.memory_space<vmem>>, vector<8x1xf32>
    tpu.vector_store %arg6[%c0_20, %c0_21], %45 {strides = array<i32>} : memref<8x1xf32, #tpu.memory_space<vmem>>, vector<8x1xf32>,
    return
  }
  func.func @transform_0(%arg0: i32, %arg1: i32) -> (i32, i32, i32) {
    %c0_i32 = arith.constant 0 : i32
    %c0_i32_0 = arith.constant 0 : i32
    return %arg0, %c0_i32, %arg1 : i32, i32, i32
  }
  func.func @transform_1(%arg0: i32, %arg1: i32) -> (i32, i32, i32) {
    %c0_i32 = arith.constant 0 : i32
    %c0_i32_0 = arith.constant 0 : i32
    return %arg0, %c0_i32, %arg1 : i32, i32, i32
  }
  func.func @transform_2(%arg0: i32, %arg1: i32) -> (i32, i32) {
    %c0_i32 = arith.constant 0 : i32
    %c0_i32_0 = arith.constant 0 : i32
    %c0_i32_1 = arith.constant 0 : i32
    return %c0_i32, %c0_i32_0 : i32, i32
  }
  func.func @transform_3(%arg0: i32, %arg1: i32) -> (i32, i32) {
    %c0_i32 = arith.constant 0 : i32
    %c0_i32_0 = arith.constant 0 : i32
    %c0_i32_1 = arith.constant 0 : i32
    return %c0_i32, %c0_i32_0 : i32, i32
  }
  func.func @transform_4(%arg0: i32, %arg1: i32) -> (i32, i32) {
    %c0_i32 = arith.constant 0 : i32
    %c0_i32_0 = arith.constant 0 : i32
    %c0_i32_1 = arith.constant 0 : i32
    return %c0_i32, %c0_i32_0 : i32, i32
  }
}

</mosaic_0001>

<llo_original>
// kernel: tpu_custom_call.1
$region0: #{tpu_custom_call.1}
  #allocation0 [shape = 'u32[]', space=smem, size = 0x4, offset = 0x4, fixed_abs, tag = 'smem constant byte address 0x4 - core index']
  #allocation1 [shape = 'u32[72,128]{1,0:T(1,128)}', space=vmem, size = 0x9000, scoped, tag = 'internal scratch']
  %s0 = inlined_call_operand.hbm [shape: f32[2,8,256], index: 0, kind: input, shape index: {}]
  %s1 = inlined_call_operand.vmem [shape: s32[2,1,256], index: 1, kind: input, shape index: {}]
  %s2 = inlined_call_operand.vmem [shape: f32[16,8], index: 2, kind: input, shape index: {}]
  %s3 = inlined_call_operand.vmem [shape: f32[8,1], index: 3, kind: output, shape index: {0}]
  %s4 = inlined_call_operand.vmem [shape: f32[8,1], index: 4, kind: output, shape index: {1}]
  %5 = xla_tuple %s3, %s4
  %s6 = sld [smem:[#allocation0]]
  $region61: #{tpu_custom_call.1} parent=0
    _
  %s8 = ssub.s32 1, %s6
  %s9 = scalar_select 0, %s8, %s6
  $region1: #{tpu_custom_call.1} parent=0
    #allocation2 [shape = 'u8[16384]{0}', space=vmem, size = 0x4000, scoped, tag = 'input window, operand 0']
    #allocation3 [shape = 's32[2]{0}', space=sflag, size = 0x8, scoped, tag = 'scoped memory for tpu_custom_call.1']
    %10 = vsyncpa [#allocation3], 0
    %s11 = scalar_lea.sflag [#allocation3], 1
    %12 = vsyncpa %s11, 0
    loop: start=0, step=1, limit=4
    $region2: #{tpu_custom_call.1} parent=1 // loop_pre_header
      _
    $region3: #{tpu_custom_call.1} parent=1 // loop_header
      %s14 = sphi 0, %s18
      %p15 = scmp.ge.s32.totalorder %s14, 4
      %s21 = sphi 0, %s33
      %s22 = sphi 0, %s29
      %s23 = sphi 0, %s21
      %s24 = sphi 0, %s22
      %s25 = sphi 0, %s23
      %s26 = sphi 0, %s24
      %s38 = sphi 0, %s40
      %s41 = sphi 0, %s38
      %s42 = sphi 0, %s41
      %s58 = sphi 0, %s42
      %s66 = sphi 0, %s68
      %s69 = sphi 0, %s66
      %s70 = sphi 0, %s69
      %s86 = sphi 0, %s70
      %s90 = sphi 0, %s90
      %s92 = sphi 0, %s90
      %s93 = sphi 0, %s92
      %s107 = sphi 0, %s93
      %s111 = sphi 0, %s111
      %s113 = sphi 0, %s111
      %s114 = sphi 0, %s113
      %s128 = sphi 0, %s114
      %s132 = sphi 0, %s132
      %s134 = sphi 0, %s132
      %s135 = sphi 0, %s134
      %s149 = sphi 0, %s135
    $region4: #{tpu_custom_call.1} parent=1 // loop_header_branch
      %17 = sbr.rel (%p15) target = $region8
    $region5: #{tpu_custom_call.1} parent=1 // loop_body
      %s19 = ssub.s32 %s14, 1
      %s20 = ssub.s32 %s14, 2
      %s27 = sadd.s32 1, %s22
      %p28 = scmp.ge.s32.totalorder %s27, 1
      %s29 = scalar_select %p28, 0, %s27
      %s30 = sadd.s32 1, %s21
      %s31 = scalar_select %p28, %s30, %s21
      %p32 = scmp.ge.s32.totalorder %s31, 2
      %s33 = scalar_select %p32, 0, %s31
      %s34 = ssub.s32 %s21, %s33
      %s35 = ssub.s32 %s22, %s29
      %s36 = sor.u32 %s34, %s35
      %p37 = scmp.eq.s32.totalorder %s36, 0
      %s39 = sadd.s32 %s38, 1
      %s40 = scalar_select %p37, %s38, %s39
      %p43 = pneg %p37
      %p44 = scmp.eq.s32.totalorder %s14, 1
      %p45 = por %p43, %p44
      %p46 = scmp.ne.s32.totalorder %s38, %s41
      %p47 = scmp.eq.s32.totalorder %s14, 0
      %p48 = por %p46, %p47
      %p49 = scmp.ne.s32.totalorder %s38, %s41
      %p50 = scmp.eq.s32.totalorder %s19, 1
      %p51 = por %p49, %p50
      %p52 = scmp.ne.s32.totalorder %s41, %s42
      %p53 = scmp.eq.s32.totalorder %s19, 0
      %p54 = por %p52, %p53
      %p55 = scmp.ne.s32.totalorder %s41, %s42
      %p56 = scmp.eq.s32.totalorder %s20, 1
      %p57 = por %p55, %p56
      %p59 = scmp.ne.s32.totalorder %s42, %s58
      %p60 = scmp.eq.s32.totalorder %s20, 0
      %p61 = por %p59, %p60
      %s62 = ssub.s32 %s21, %s33
      %s63 = ssub.s32 %s22, %s29
      %s64 = sor.u32 %s62, %s63
      %p65 = scmp.eq.s32.totalorder %s64, 0
      %s67 = sadd.s32 %s66, 1
      %s68 = scalar_select %p65, %s66, %s67
      %p71 = pneg %p65
      %p72 = scmp.eq.s32.totalorder %s14, 1
      %p73 = por %p71, %p72
      %p74 = scmp.ne.s32.totalorder %s66, %s69
      %p75 = scmp.eq.s32.totalorder %s14, 0
      %p76 = por %p74, %p75
      %p77 = scmp.ne.s32.totalorder %s66, %s69
      %p78 = scmp.eq.s32.totalorder %s19, 1
      %p79 = por %p77, %p78
      %p80 = scmp.ne.s32.totalorder %s69, %s70
      %p81 = scmp.eq.s32.totalorder %s19, 0
      %p82 = por %p80, %p81
      %p83 = scmp.ne.s32.totalorder %s69, %s70
      %p84 = scmp.eq.s32.totalorder %s20, 1
      %p85 = por %p83, %p84
      %p87 = scmp.ne.s32.totalorder %s70, %s86
      %p88 = scmp.eq.s32.totalorder %s20, 0
      %p89 = por %p87, %p88
      %s91 = sadd.s32 %s90, 1
      %p94 = scmp.eq.s32.totalorder %s14, 1
      %p95 = scmp.ne.s32.totalorder %s90, %s92
      %p96 = scmp.eq.s32.totalorder %s14, 0
      %p97 = por %p95, %p96
      %p98 = scmp.ne.s32.totalorder %s90, %s92
      %p99 = scmp.eq.s32.totalorder %s19, 1
      %p100 = por %p98, %p99
      %p101 = scmp.ne.s32.totalorder %s92, %s93
      %p102 = scmp.eq.s32.totalorder %s19, 0
      %p103 = por %p101, %p102
      %p104 = scmp.ne.s32.totalorder %s92, %s93
      %p105 = scmp.eq.s32.totalorder %s20, 1
      %p106 = por %p104, %p105
      %p108 = scmp.ne.s32.totalorder %s93, %s107
      %p109 = scmp.eq.s32.totalorder %s20, 0
      %p110 = por %p108, %p109
      %s112 = sadd.s32 %s111, 1
      %p115 = scmp.eq.s32.totalorder %s14, 1
      %p116 = scmp.ne.s32.totalorder %s111, %s113
      %p117 = scmp.eq.s32.totalorder %s14, 0
      %p118 = por %p116, %p117
      %p119 = scmp.ne.s32.totalorder %s111, %s113
      %p120 = scmp.eq.s32.totalorder %s19, 1
      %p121 = por %p119, %p120
      %p122 = scmp.ne.s32.totalorder %s113, %s114
      %p123 = scmp.eq.s32.totalorder %s19, 0
      %p124 = por %p122, %p123
      %p125 = scmp.ne.s32.totalorder %s113, %s114
      %p126 = scmp.eq.s32.totalorder %s20, 1
      %p127 = por %p125, %p126
      %p129 = scmp.ne.s32.totalorder %s114, %s128
      %p130 = scmp.eq.s32.totalorder %s20, 0
      %p131 = por %p129, %p130
      %s133 = sadd.s32 %s132, 1
      %p136 = scmp.eq.s32.totalorder %s14, 1
      %p137 = scmp.ne.s32.totalorder %s132, %s134
      %p138 = scmp.eq.s32.totalorder %s14, 0
      %p139 = por %p137, %p138
      %p140 = scmp.ne.s32.totalorder %s132, %s134
      %p141 = scmp.eq.s32.totalorder %s19, 1
      %p142 = por %p140, %p141
      %p143 = scmp.ne.s32.totalorder %s134, %s135
      %p144 = scmp.eq.s32.totalorder %s19, 0
      %p145 = por %p143, %p144
      %p146 = scmp.ne.s32.totalorder %s134, %s135
      %p147 = scmp.eq.s32.totalorder %s20, 1
      %p148 = por %p146, %p147
      %p150 = scmp.ne.s32.totalorder %s135, %s149
      %p151 = scmp.eq.s32.totalorder %s20, 0
      %p152 = por %p150, %p151
      %p153 = scmp.le.s32.totalorder 1, %s14
      %p154 = scmp.lt.s32.totalorder %s14, 3
      %p155 = pnand %p153, %p154
      %p156 = pneg %p155
      // Predicated region
      $region9: #{tpu_custom_call.1} parent=5 // pred_check
        _
      $region10: #{tpu_custom_call.1} parent=5 // pred_check_branch
        %158 = sbr.rel (%p155) target = $region12
      $region11: #{tpu_custom_call.1} parent=5 // pred_region
        %s159 = ssub.s32 %s14, 1
        // Predicated region
        $region13: #{tpu_custom_call.1} parent=11 // pred_check
          %p160 = pneg %p103
        $region14: #{tpu_custom_call.1} parent=11 // pred_check_branch
          %162 = sbr.rel (%p160) target = $region16
        $region15: #{tpu_custom_call.1} parent=11 // pred_region
          _
        $region16: #{tpu_custom_call.1} parent=11 // pred_fallthru
          _
      $region12: #{tpu_custom_call.1} parent=5 // pred_fallthru
        _
      %p163 = scmp.lt.s32.totalorder %s14, 2
      // Predicated region
      $region17: #{tpu_custom_call.1} parent=5 // pred_check
        %p164 = pneg %p163
      $region18: #{tpu_custom_call.1} parent=5 // pred_check_branch
        %166 = sbr.rel (%p164) target = $region20
      $region19: #{tpu_custom_call.1} parent=5 // pred_region
        // Predicated region
        $region21: #{tpu_custom_call.1} parent=19 // pred_check
          %p167 = pneg %p48
        $region22: #{tpu_custom_call.1} parent=19 // pred_check_branch
          %169 = sbr.rel (%p167) target = $region24
        $region23: #{tpu_custom_call.1} parent=19 // pred_region
          %s170 = sand.u32 %s38, 1
          %s171 = scalar_lea.sflag [#allocation3], %s170
          %s172 = sand.u32 %s38, 1
          %s173 = smul.addr %s172, 16
          %s174 = scalar_lea.vmem [#allocation2], %s173
          %s175 = smul.u32 2, %s22
          %177 = vsyncadd %s171, 0
          %s178 = smul.addr %s21, 2
          %s179 = sadd.s32 %s175, %s178
          %s180 = smul.addr %s179, 8
          %s181 = scalar_lea.hbm %s0, %s180
          %s183 = sshll.u32 %s181, 4
          %s184 = int_to_ptr.hbm [resolvable:$true] %s183
          %s185 = sshll.u32 %s174, 4
          %s186 = int_to_ptr.vmem [resolvable:$true] %s185
          %188 = dma.hbm_to_vmem [thread:$0]  %s184, 256, %s186, %s171
        $region24: #{tpu_custom_call.1} parent=19 // pred_fallthru
          _
        // Predicated region
        $region25: #{tpu_custom_call.1} parent=19 // pred_check
          %p189 = pneg %p76
        $region26: #{tpu_custom_call.1} parent=19 // pred_check_branch
          %191 = sbr.rel (%p189) target = $region28
        $region27: #{tpu_custom_call.1} parent=19 // pred_region
          %s192 = smul.u32 2, %s22
          %p193 = scmp.lt.s32.totalorder %s21, 1
          %s194 = scalar_select %p193, %s21, 1
          %p195 = scmp.lt.s32.totalorder %s192, 1
          %s196 = scalar_select %p195, %s192, 1
          %s197 = smul.addr %s194, 2
          %s198 = sadd.s32 %s196, %s197
          %s199 = scalar_lea.vmem %s1, %s198
          %s200 = smul.u32 2, %s22
        $region28: #{tpu_custom_call.1} parent=19 // pred_fallthru
          _
      $region20: #{tpu_custom_call.1} parent=5 // pred_fallthru
        _
      %p201 = scmp.le.s32.totalorder 1, %s14
      %p202 = scmp.lt.s32.totalorder %s14, 3
      %p203 = pnand %p201, %p202
      %p204 = pneg %p203
      // Predicated region
      $region29: #{tpu_custom_call.1} parent=5 // pred_check
        _
      $region30: #{tpu_custom_call.1} parent=5 // pred_check_branch
        %206 = sbr.rel (%p203) target = $region32
      $region31: #{tpu_custom_call.1} parent=5 // pred_region
        %s207 = ssub.s32 %s14, 1
        %s208 = sand.u32 %s41, 1
        %s209 = scalar_lea.sflag [#allocation3], %s208
        %s210 = sand.u32 %s41, 1
        %s211 = smul.addr %s210, 16
        %s212 = scalar_lea.vmem [#allocation2], %s211
        // Predicated region
        $region33: #{tpu_custom_call.1} parent=31 // pred_check
          %p213 = pneg %p54
        $region34: #{tpu_custom_call.1} parent=31 // pred_check_branch
          %215 = sbr.rel (%p213) target = $region36
        $region35: #{tpu_custom_call.1} parent=31 // pred_region
          %217 = dma.done %s209, 256
        $region36: #{tpu_custom_call.1} parent=31 // pred_fallthru
          _
        %s218 = sand.u32 %s41, 1
        %s219 = scalar_lea.sflag [#allocation3], %s218
        %s220 = sand.u32 %s41, 1
        %s221 = smul.addr %s220, 16
        %s222 = scalar_lea.vmem [#allocation2], %s221
        %p223 = pneg %p54
        %p224 = pneg %p51
        %s225 = smul.u32 2, %s24
        %p226 = scmp.lt.s32.totalorder %s23, 1
        %s227 = scalar_select %p226, %s23, 1
        %p228 = scmp.lt.s32.totalorder %s225, 1
        %s229 = scalar_select %p228, %s225, 1
        %s230 = smul.addr %s227, 2
        %s231 = sadd.s32 %s229, %s230
        %s232 = scalar_lea.vmem %s1, %s231
        %p233 = pneg %p82
        %p234 = pneg %p79
        %p235 = pneg %p103
        %p236 = pneg %p100
        %p237 = pneg %p124
        %p238 = pneg %p121
        %p239 = pneg %p145
        %p240 = pneg %p142
        %s241 = smul.u32 2, %s24
        %s242 = smul.u32 2, %s24
        %p243 = scmp.lt.s32.totalorder %s23, 1
        %s244 = scalar_select %p243, %s23, 1
        %p245 = scmp.lt.s32.totalorder %s242, 1
        %s246 = scalar_select %p245, %s242, 1
        %s247 = smul.addr %s244, 2
        %s248 = sadd.s32 %s246, %s247
        %s249 = scalar_lea.vmem %s1, %s248
        %s250 = smul.u32 2, %s24
        %p251 = scmp.eq.s32.totalorder %s23, 0
        %p252 = scmp.eq.s32.totalorder %s24, 0
        %p253 = pnand %p251, %p252
        %p254 = pneg %p253
        // Predicated region
        $region37: #{tpu_custom_call.1} parent=31 // pred_check
          _
        $region38: #{tpu_custom_call.1} parent=31 // pred_check_branch
          %256 = sbr.rel (%p253) target = $region40
        $region39: #{tpu_custom_call.1} parent=31 // pred_region
          %vm257 = vcmask 7168
          %258 = vst.msk [vmem:[%s3] sm:$0xff] %vm257, 0.0
          %259 = vst.msk [vmem:[%s4] sm:$0xff] %vm257, 0.0
        $region40: #{tpu_custom_call.1} parent=31 // pred_fallthru
          _
        %v260 = vld [vmem:[%s212] sm:$0xff]
        %v261 = vld [vmem:[%s212 + $0x8] sm:$0xff]
        %v262 = vld [vmem:[%s249] sm:$0x3]
        %v263 = vlaneseq
        %v264 = vand.u32 %v263, 127
        %v265 = vadd.s32 %v264, 128
        %s266 = smul.u32 %s24, 256
        %v267 = vstv %s266
        %v268 = vadd.s32 %v267, %v264
        %v269 = vadd.s32 %v267, %v265
        %vm270 = vcmp.lt.s32.totalorder %v268, 256
        %vm271 = vcmp.lt.s32.totalorder %v269, 256
        %v272 = vlaneseq
        %v273 = vshrl.u32 %v272, 7
        %v274 = vperm.slane %v262, 0
        %v275 = vperm.slane %v262, 1
        %vm276 = vcmp.eq.s32.totalorder %v274, %v273
        %vm277 = vcmp.eq.s32.totalorder %v275, %v273
        %v278 = vsel %vm270, 1, 0
        %v279 = vsel %vm271, 1, 0
        %vm280 = vcmp.eq.s32.totalorder %v278, 1
        %vm281 = vcmp.eq.s32.totalorder %v279, 1
        %vm282 = vmand %vm276, %vm280
        %vm283 = vmand %vm277, %vm281
        %v284 = vsel %vm282, 1, 0
        %v285 = vsel %vm283, 1, 0
        %v286 = vcvt.s32.f32 %v284
        %v287 = vcvt.s32.f32 %v285
        %v288 = vld [vmem:[%s2] sm:$0xff]
        %v289 = vld [vmem:[%s2 + $0x8] sm:$0xff]
        %vm290 = vcmask 64512
        %v292 = vsel %vm290, %v288, 0
        %v295 = vsel %vm290, %v289, 0
        %297 = vmatpush.msra.mxu0 0.0
        %298 = vmatpush.msra.mxu0 0.0
        %299 = vmatpush.msra.mxu0 0.0
        %300 = vmatpush.msra.mxu0 0.0
        %301 = vmatpush.msra.mxu0 0.0
        %302 = vmatpush.msra.mxu0 0.0
        %303 = vmatpush.msra.mxu0 0.0
        %304 = vmatpush.msra.mxu0 0.0
        %305 = vmatpush.msra.mxu0 0.0
        %306 = vmatpush.msra.mxu0 0.0
        %307 = vmatpush.msra.mxu0 0.0
        %308 = vmatpush.msra.mxu0 0.0
        %309 = vmatpush.msra.mxu0 0.0
        %310 = vmatpush.msra.mxu0 0.0
        %311 = vmatpush.msra.mxu0 0.0
        %312 = vmatpush.msra.mxu0 %v286
        %313 = vmatmul.f32.gmra.mxu0 %v292
        %v314 = vpop.f32.mrf.mxu0
        %v315 = vadd.f32 0.0, %v314
        %316 = vmatmul.f32.gmra.mxu0 %v295
        %v317 = vpop.f32.mrf.mxu0
        %v318 = vadd.f32 0.0, %v317
        %319 = vdwg.mxu0
        %320 = vmatpush.msra.mxu0 0.0
        %321 = vmatpush.msra.mxu0 0.0
        %322 = vmatpush.msra.mxu0 0.0
        %323 = vmatpush.msra.mxu0 0.0
        %324 = vmatpush.msra.mxu0 0.0
        %325 = vmatpush.msra.mxu0 0.0
        %326 = vmatpush.msra.mxu0 0.0
        %327 = vmatpush.msra.mxu0 0.0
        %328 = vmatpush.msra.mxu0 0.0
        %329 = vmatpush.msra.mxu0 0.0
        %330 = vmatpush.msra.mxu0 0.0
        %331 = vmatpush.msra.mxu0 0.0
        %332 = vmatpush.msra.mxu0 0.0
        %333 = vmatpush.msra.mxu0 0.0
        %334 = vmatpush.msra.mxu0 0.0
        %335 = vmatpush.msra.mxu0 %v287
        %336 = vmatmul.f32.gmra.mxu0 %v292
        %v337 = vpop.f32.mrf.mxu0
        %v338 = vadd.f32 0.0, %v337
        %339 = vmatmul.f32.gmra.mxu0 %v295
        %v340 = vpop.f32.mrf.mxu0
        %v341 = vadd.f32 0.0, %v340
        %342 = vdwg.mxu0
        %v343 = vsub.f32 %v260, %v315
        %v344 = vsub.f32 %v261, %v338
        %v345 = vand.u32 2147483647, %v343
        %v346 = vand.u32 2147483647, %v344
        %v347 = vmul.f32 %v345, %v318
        %v348 = vmul.f32 %v346, %v341
        %v349 = vsel %vm280, %v347, 0.0
        %v350 = vsel %vm281, %v348, 0.0
        %v351 = vrot.slane %v349, 4
        %v352 = vadd.f32 %v349, %v351
        %v353 = vrot.slane %v352, 2
        %v354 = vadd.f32 %v352, %v353
        %v355 = vrot.slane %v354, 1
        %v356 = vadd.f32 %v354, %v355
        %v357 = vrot.slane %v350, 4
        %v358 = vadd.f32 %v350, %v357
        %v359 = vrot.slane %v358, 2
        %v360 = vadd.f32 %v358, %v359
        %v361 = vrot.slane %v360, 1
        %v362 = vadd.f32 %v360, %v361
        %v363 = vld [vmem:[%s3] sm:$0xff]
        %v364 = vmul.f32 %v286, %v356
        %v365 = vmul.f32 %v287, %v362
        %v366 = vadd.f32 %v364, %v365
        %367 = vadd.xlane.f32.xlu0 %v366
        %v368 = vpop.xlane.xlu0 %367
        %v369 = vadd.f32 %v363, %v368
        %vm370 = vcmask 7168
        %371 = vst.msk [vmem:[%s3] sm:$0xff] %vm370, %v369
        %v372 = vld [vmem:[%s4] sm:$0xff]
        %v373 = vadd.f32 %v286, %v287
        %374 = vadd.xlane.f32.xlu0 %v373
        %v375 = vpop.xlane.xlu0 %374
        %v376 = vadd.f32 %v372, %v375
        %377 = vst.msk [vmem:[%s4] sm:$0xff] %vm370, %v376
        // Predicated region
        $region41: #{tpu_custom_call.1} parent=31 // pred_check
          %p378 = pneg %p121
        $region42: #{tpu_custom_call.1} parent=31 // pred_check_branch
          %380 = sbr.rel (%p378) target = $region44
        $region43: #{tpu_custom_call.1} parent=31 // pred_region
          _
        $region44: #{tpu_custom_call.1} parent=31 // pred_fallthru
          _
        // Predicated region
        $region45: #{tpu_custom_call.1} parent=31 // pred_check
          %p381 = pneg %p142
        $region46: #{tpu_custom_call.1} parent=31 // pred_check_branch
          %383 = sbr.rel (%p381) target = $region48
        $region47: #{tpu_custom_call.1} parent=31 // pred_region
          _
        $region48: #{tpu_custom_call.1} parent=31 // pred_fallthru
          _
        // Predicated region
        $region49: #{tpu_custom_call.1} parent=31 // pred_check
          %p384 = pneg %p121
        $region50: #{tpu_custom_call.1} parent=31 // pred_check_branch
          %386 = sbr.rel (%p384) target = $region52
        $region51: #{tpu_custom_call.1} parent=31 // pred_region
          _
        $region52: #{tpu_custom_call.1} parent=31 // pred_fallthru
          _
        // Predicated region
        $region53: #{tpu_custom_call.1} parent=31 // pred_check
          %p387 = pneg %p142
        $region54: #{tpu_custom_call.1} parent=31 // pred_check_branch
          %389 = sbr.rel (%p387) target = $region56
        $region55: #{tpu_custom_call.1} parent=31 // pred_region
          _
        $region56: #{tpu_custom_call.1} parent=31 // pred_fallthru
          _
      $region32: #{tpu_custom_call.1} parent=5 // pred_fallthru
        _
      %p390 = scmp.le.s32.totalorder 2, %s14
      // Predicated region
      $region57: #{tpu_custom_call.1} parent=5 // pred_check
        %p391 = pneg %p390
      $region58: #{tpu_custom_call.1} parent=5 // pred_check_branch
        %393 = sbr.rel (%p391) target = $region60
      $region59: #{tpu_custom_call.1} parent=5 // pred_region
        %s394 = ssub.s32 %s14, 2
      $region60: #{tpu_custom_call.1} parent=5 // pred_fallthru
        _
    $region6: #{tpu_custom_call.1} parent=1 // loop_footer
      %s18 = sadd.s32 1, %s14
    $region7: #{tpu_custom_call.1} parent=1 // loop_footer_branch
      %13 = sbr.rel target = $region3
    $region8: #{tpu_custom_call.1} parent=1 // loop_exit
      _
    %395 = vsyncpa [#allocation3], 1
    %s396 = scalar_lea.sflag [#allocation3], 1
    %397 = vsyncpa %s396, 1

</llo_original>
